<compile_context>
chip_gen: v5e
topology: v5e:2x2
jax: 0.10.0
libtpu: 0.0.40
codegen_flags: <defaults>
</compile_context>

<pallas_src>
import jax
import jax.numpy as jnp
from jax.experimental import pallas as pl
from jax.experimental.pallas import tpu as pltpu


def _fusion_kernel(s1_ref, s2_ref, w_ref, b_ref, o_ref):
    # Blocks: s1/s2/o -> (1, C, TQ); w -> (4, C, C); b -> (2, C, 1).
    s1 = s1_ref[0]                      # (C, TQ), native dtype (lane-dense)
    s2 = s2_ref[0]                      # (C, TQ)

    wa1 = w_ref[0]                      # (C, C)
    wa2 = w_ref[1]
    wf1 = w_ref[2]
    wf2 = w_ref[3]
    ba = b_ref[0]                       # (C, 1), f32 -> lane broadcast
    bf = b_ref[1]                       # (C, 1), f32

    # attention conv + sigmoid (channel concat folded into split matmuls)
    pre = (jnp.dot(wa1, s1, preferred_element_type=jnp.float32)
           + jnp.dot(wa2, s2, preferred_element_type=jnp.float32)
           + ba)
    att = jax.nn.sigmoid(pre)           # (C, TQ), f32

    # fusion conv on [s1*att ; s2*(1-att)], again as split matmuls
    s1f = s1.astype(jnp.float32)
    s2f = s2.astype(jnp.float32)
    w1 = (s1f * att).astype(wf1.dtype)
    w2 = (s2f * (1.0 - att)).astype(wf2.dtype)
    out = (jnp.dot(wf1, w1, preferred_element_type=jnp.float32)
           + jnp.dot(wf2, w2, preferred_element_type=jnp.float32)
           + bf)

    o_ref[0] = out.astype(o_ref.dtype)


def _choose_tile_q(Q, C, itemsize):
    """Pick a lane tile: ~2 MiB input blocks, VMEM-footprint capped (v7x-safe)."""
    target_block_bytes = 2 << 20        # ~2 MiB per input block
    vmem_budget = 24 << 20              # pipelined-footprint cap
    if Q * C * itemsize <= target_block_bytes:
        return Q                        # single block along Q (full extent)
    tq = max(512, ((target_block_bytes // (C * itemsize)) // 128) * 128)
    # footprint per lane: 2 inputs x 2 bufs + 2 out bufs (input dtype)
    # + ~4 f32 intermediates (pre/att/weighted x2)
    per_q_bytes = C * (6 * itemsize + 4 * 4)
    tq_cap = max(128, (int(vmem_budget // per_q_bytes) // 128) * 128)
    tq = min(tq, tq_cap)
    return Q if tq >= Q else tq


def mid_level_fusion_attention(s1, s2, wa, ba, wf, bf):
    """s1, s2: (N, C, D, H, W).  wa, wf: (C, 2C) PyTorch Conv3d(k=1) weights
    (out, in), kernel dims already squeezed.  ba, bf: (C,).
    Returns (N, C, D, H, W)."""
    N, C, D, H, W = s1.shape
    Q = D * H * W
    itemsize = jnp.dtype(s1.dtype).itemsize

    # NCDHW is already (N, C, Q)-contiguous: reshape only, no transpose/pad.
    s1q = s1.reshape(N, C, Q)
    s2q = s2.reshape(N, C, Q)

    # Split PyTorch (C, 2C) weights into (C, C) halves, pre-cast once, and
    # pack into single operands (fewer tiny resident buffers).
    w_packed = jnp.stack([wa[:, :C], wa[:, C:], wf[:, :C], wf[:, C:]],
                         axis=0).astype(s1.dtype)                  # (4, C, C)
    b_packed = jnp.stack([ba.reshape(C, 1), bf.reshape(C, 1)],
                         axis=0).astype(jnp.float32)               # (2, C, 1)

    tq = _choose_tile_q(Q, C, itemsize)
    n_q = pl.cdiv(Q, tq)                # ragged tail masked by Pallas

    # VMEM limit from actual block footprint (+headroom), clamped for v7x.
    block_bytes = C * tq * itemsize
    need = (6 * block_bytes                 # double-buffered s1/s2 + out
            + 4 * C * tq * 4                # f32 intermediates in the body
            + 2 * (4 * C * C + 2 * C) * max(itemsize, 4))  # weights/biases
    vmem_limit = int(min(48 << 20, max(32 << 20, 2 * need)))

    # Grid ordered (spatial, batch): spatial axis carries the megacore split.
    grid = (n_q, N)

    out_q = pl.pallas_call(
        _fusion_kernel,
        out_shape=jax.ShapeDtypeStruct((N, C, Q), s1.dtype),
        grid_spec=pltpu.PrefetchScalarGridSpec(
            num_scalar_prefetch=0,
            grid=grid,
            in_specs=[
                pl.BlockSpec((1, C, tq), lambda q, n: (n, 0, q)),   # s1 tile
                pl.BlockSpec((1, C, tq), lambda q, n: (n, 0, q)),   # s2 tile
                pl.BlockSpec((4, C, C), lambda q, n: (0, 0, 0)),    # weights
                pl.BlockSpec((2, C, 1), lambda q, n: (0, 0, 0)),    # biases
            ],
            out_specs=pl.BlockSpec((1, C, tq), lambda q, n: (n, 0, q)),
        ),
        compiler_params=pltpu.CompilerParams(
            dimension_semantics=("parallel", "parallel"),
            vmem_limit_bytes=vmem_limit,
        ),
    )(s1q, s2q, w_packed, b_packed)

    return out_q.reshape(N, C, D, H, W)


def _reference(s1, s2, wa, ba, wf, bf):
    """Pure-JAX reference mirroring the PyTorch forward (NCDHW, 1x1x1 convs)."""
    comb = jnp.concatenate([s1, s2], axis=1)                       # (N, 2C, D, H, W)
    pre = jnp.einsum('ncdhw,oc->nodhw', comb, wa) + ba[None, :, None, None, None]
    att = jax.nn.sigmoid(pre)
    weighted = jnp.concatenate([s1 * att, s2 * (1.0 - att)], axis=1)
    return jnp.einsum('ncdhw,oc->nodhw', weighted, wf) + bf[None, :, None, None, None]


if __name__ == "__main__":
    key = jax.random.PRNGKey(0)
    N, C, D, H, W = 2, 4, 4, 8, 8   # small shapes; Q = D*H*W = 256

    k1, k2, k3, k4, k5, k6 = jax.random.split(key, 6)
    s1 = jax.random.normal(k1, (N, C, D, H, W), dtype=jnp.float32)
    s2 = jax.random.normal(k2, (N, C, D, H, W), dtype=jnp.float32)

    # Conv3d(2C -> C, kernel_size=1): weight (C_out, C_in) (kernel dims squeezed),
    # bias (C_out,).
    wa = 0.1 * jax.random.normal(k3, (C, 2 * C), dtype=jnp.float32)
    ba = 0.1 * jax.random.normal(k4, (C,), dtype=jnp.float32)
    wf = 0.1 * jax.random.normal(k5, (C, 2 * C), dtype=jnp.float32)
    bf = 0.1 * jax.random.normal(k6, (C,), dtype=jnp.float32)

    out = mid_level_fusion_attention(s1, s2, wa, ba, wf, bf)
    out = jax.block_until_ready(out)

    ref = _reference(s1, s2, wa, ba, wf, bf)
    assert out.shape == (N, C, D, H, W)
    assert jnp.allclose(out, ref, atol=1e-4, rtol=1e-5), float(jnp.max(jnp.abs(out - ref)))

    print("KERNEL_OK")
</pallas_src>

<mosaic_0001>
module attributes {stable_mosaic.version = 11 : i64} {
  func.func @_fusion_kernel(%arg0: i32, %arg1: i32, %arg2: memref<1x4x256xf32, #tpu.memory_space<vmem>>, %arg3: memref<1x4x256xf32, #tpu.memory_space<vmem>>, %arg4: memref<4x4x4xf32, #tpu.memory_space<vmem>>, %arg5: memref<2x4x1xf32, #tpu.memory_space<vmem>>, %arg6: memref<1x4x256xf32, #tpu.memory_space<vmem>>) attributes {dimension_semantics = [#tpu.dimension_semantics<parallel>, #tpu.dimension_semantics<parallel>], iteration_bounds = array<i64: 1, 2>, scalar_prefetch = 0 : i64, scratch_operands = 0 : i64, tpu.core_type = #tpu.core_type<tc>, window_params = [{transform_indices = @transform_0, window_bounds = array<i64: 1, 4, 256>}, {transform_indices = @transform_1, window_bounds = array<i64: 1, 4, 256>}, {pipeline_mode = #tpu.pipeline_mode<synchronous>, transform_indices = @transform_2, window_bounds = array<i64: 4, 4, 4>}, {pipeline_mode = #tpu.pipeline_mode<synchronous>, transform_indices = @transform_3, window_bounds = array<i64: 2, 4, 1>}, {transform_indices = @transform_4, window_bounds = array<i64: 1, 4, 256>}]} {
    %c0 = arith.constant 0 : index
    %c0_0 = arith.constant 0 : index
    %c0_1 = arith.constant 0 : index
    %0 = vector.load %arg2[%c0, %c0_0, %c0_1] : memref<1x4x256xf32, #tpu.memory_space<vmem>>, vector<1x4x256xf32>
    %1 = vector.shape_cast %0 : vector<1x4x256xf32> to vector<4x256xf32>
    %c0_2 = arith.constant 0 : index
    %c0_3 = arith.constant 0 : index
    %c0_4 = arith.constant 0 : index
    %2 = vector.load %arg3[%c0_2, %c0_3, %c0_4] : memref<1x4x256xf32, #tpu.memory_space<vmem>>, vector<1x4x256xf32>
    %3 = vector.shape_cast %2 : vector<1x4x256xf32> to vector<4x256xf32>
    %c0_5 = arith.constant 0 : index
    %c0_6 = arith.constant 0 : index
    %c0_7 = arith.constant 0 : index
    %4 = vector.load %arg4[%c0_5, %c0_6, %c0_7] : memref<4x4x4xf32, #tpu.memory_space<vmem>>, vector<1x4x4xf32>
    %5 = vector.shape_cast %4 : vector<1x4x4xf32> to vector<4x4xf32>
    %c1 = arith.constant 1 : index
    %c0_8 = arith.constant 0 : index
    %c0_9 = arith.constant 0 : index
    %6 = vector.load %arg4[%c1, %c0_8, %c0_9] : memref<4x4x4xf32, #tpu.memory_space<vmem>>, vector<1x4x4xf32>
    %7 = vector.shape_cast %6 : vector<1x4x4xf32> to vector<4x4xf32>
    %c2 = arith.constant 2 : index
    %c0_10 = arith.constant 0 : index
    %c0_11 = arith.constant 0 : index
    %8 = vector.load %arg4[%c2, %c0_10, %c0_11] : memref<4x4x4xf32, #tpu.memory_space<vmem>>, vector<1x4x4xf32>
    %9 = vector.shape_cast %8 : vector<1x4x4xf32> to vector<4x4xf32>
    %c3 = arith.constant 3 : index
    %c0_12 = arith.constant 0 : index
    %c0_13 = arith.constant 0 : index
    %10 = vector.load %arg4[%c3, %c0_12, %c0_13] : memref<4x4x4xf32, #tpu.memory_space<vmem>>, vector<1x4x4xf32>
    %11 = vector.shape_cast %10 : vector<1x4x4xf32> to vector<4x4xf32>
    %c0_14 = arith.constant 0 : index
    %c0_15 = arith.constant 0 : index
    %c0_16 = arith.constant 0 : index
    %12 = vector.load %arg5[%c0_14, %c0_15, %c0_16] : memref<2x4x1xf32, #tpu.memory_space<vmem>>, vector<1x4x1xf32>
    %13 = vector.shape_cast %12 : vector<1x4x1xf32> to vector<4x1xf32>
    %c1_17 = arith.constant 1 : index
    %c0_18 = arith.constant 0 : index
    %c0_19 = arith.constant 0 : index
    %14 = vector.load %arg5[%c1_17, %c0_18, %c0_19] : memref<2x4x1xf32, #tpu.memory_space<vmem>>, vector<1x4x1xf32>
    %15 = vector.shape_cast %14 : vector<1x4x1xf32> to vector<4x1xf32>
    %cst = arith.constant dense<0.000000e+00> : vector<4x256xf32>
    %16 = tpu.matmul %5, %1, %cst {dimension_numbers = #tpu.dot_dimension_numbers<[1], [0], [0], [1], [0, 0, 1, 1], [], []>} : vector<4x4xf32>, vector<4x256xf32>, vector<4x256xf32> -> vector<4x256xf32>
    %cst_20 = arith.constant dense<0.000000e+00> : vector<4x256xf32>
    %17 = tpu.matmul %7, %3, %cst_20 {dimension_numbers = #tpu.dot_dimension_numbers<[1], [0], [0], [1], [0, 0, 1, 1], [], []>} : vector<4x4xf32>, vector<4x256xf32>, vector<4x256xf32> -> vector<4x256xf32>
    %18 = arith.addf %16, %17 : vector<4x256xf32>
    %19 = vector.broadcast %13 : vector<4x1xf32> to vector<4x256xf32>
    %20 = arith.addf %18, %19 : vector<4x256xf32>
    %21 = arith.negf %20 : vector<4x256xf32>
    %22 = math.exp %21 : vector<4x256xf32>
    %cst_21 = arith.constant 1.000000e+00 : f32
    %23 = vector.broadcast %cst_21 : f32 to vector<4x256xf32>
    %24 = arith.addf %23, %22 : vector<4x256xf32>
    %25 = arith.divf %23, %24 : vector<4x256xf32>
    %26 = arith.mulf %1, %25 : vector<4x256xf32>
    %cst_22 = arith.constant 1.000000e+00 : f32
    %27 = vector.broadcast %cst_22 : f32 to vector<4x256xf32>
    %28 = arith.subf %27, %25 : vector<4x256xf32>
    %29 = arith.mulf %3, %28 : vector<4x256xf32>
    %cst_23 = arith.constant dense<0.000000e+00> : vector<4x256xf32>
    %30 = tpu.matmul %9, %26, %cst_23 {dimension_numbers = #tpu.dot_dimension_numbers<[1], [0], [0], [1], [0, 0, 1, 1], [], []>} : vector<4x4xf32>, vector<4x256xf32>, vector<4x256xf32> -> vector<4x256xf32>
    %cst_24 = arith.constant dense<0.000000e+00> : vector<4x256xf32>
    %31 = tpu.matmul %11, %29, %cst_24 {dimension_numbers = #tpu.dot_dimension_numbers<[1], [0], [0], [1], [0, 0, 1, 1], [], []>} : vector<4x4xf32>, vector<4x256xf32>, vector<4x256xf32> -> vector<4x256xf32>
    %32 = arith.addf %30, %31 : vector<4x256xf32>
    %33 = vector.broadcast %15 : vector<4x1xf32> to vector<4x256xf32>
    %34 = arith.addf %32, %33 : vector<4x256xf32>
    %c0_25 = arith.constant 0 : index
    %c0_26 = arith.constant 0 : index
    %c0_27 = arith.constant 0 : index
    %35 = vector.load %arg6[%c0_25, %c0_26, %c0_27] : memref<1x4x256xf32, #tpu.memory_space<vmem>>, vector<1x4x256xf32>
    %36 = vector.shape_cast %35 : vector<1x4x256xf32> to vector<4x256xf32>
    %37 = vector.shape_cast %34 : vector<4x256xf32> to vector<1x4x256xf32>
    tpu.vector_store %arg6[%c0_25, %c0_26, %c0_27], %37 {strides = array<i32>} : memref<1x4x256xf32, #tpu.memory_space<vmem>>, vector<1x4x256xf32>,
    return
  }
  func.func @transform_0(%arg0: i32, %arg1: i32) -> (i32, i32, i32) {
    %c0_i32 = arith.constant 0 : i32
    %c0_i32_0 = arith.constant 0 : i32
    return %arg1, %c0_i32, %arg0 : i32, i32, i32
  }
  func.func @transform_1(%arg0: i32, %arg1: i32) -> (i32, i32, i32) {
    %c0_i32 = arith.constant 0 : i32
    %c0_i32_0 = arith.constant 0 : i32
    return %arg1, %c0_i32, %arg0 : i32, i32, i32
  }
  func.func @transform_2(%arg0: i32, %arg1: i32) -> (i32, i32, i32) {
    %c0_i32 = arith.constant 0 : i32
    %c0_i32_0 = arith.constant 0 : i32
    %c0_i32_1 = arith.constant 0 : i32
    %c0_i32_2 = arith.constant 0 : i32
    return %c0_i32, %c0_i32_0, %c0_i32_1 : i32, i32, i32
  }
  func.func @transform_3(%arg0: i32, %arg1: i32) -> (i32, i32, i32) {
    %c0_i32 = arith.constant 0 : i32
    %c0_i32_0 = arith.constant 0 : i32
    %c0_i32_1 = arith.constant 0 : i32
    %c0_i32_2 = arith.constant 0 : i32
    return %c0_i32, %c0_i32_0, %c0_i32_1 : i32, i32, i32
  }
  func.func @transform_4(%arg0: i32, %arg1: i32) -> (i32, i32, i32) {
    %c0_i32 = arith.constant 0 : i32
    %c0_i32_0 = arith.constant 0 : i32
    return %arg1, %c0_i32, %arg0 : i32, i32, i32
  }
}

</mosaic_0001>

<llo_original>
// kernel: tpu_custom_call.1
$region0: #{tpu_custom_call.1}
  #allocation0 [shape = 'u32[]', space=smem, size = 0x4, offset = 0x4, fixed_abs, tag = 'smem constant byte address 0x4 - core index']
  #allocation1 [shape = 'u32[72,128]{1,0:T(1,128)}', space=vmem, size = 0x9000, scoped, tag = 'internal scratch']
  %s0 = inlined_call_operand.hbm [shape: f32[2,4,256], index: 0, kind: input, shape index: {}]
  %s1 = inlined_call_operand.hbm [shape: f32[2,4,256], index: 1, kind: input, shape index: {}]
  %s2 = inlined_call_operand.hbm [shape: f32[4,4,4], index: 2, kind: input, shape index: {}]
  %s3 = inlined_call_operand.vmem [shape: f32[2,4,1], index: 3, kind: input, shape index: {}]
  %s4 = inlined_call_operand.hbm [shape: f32[2,4,256], index: 4, kind: output, shape index: {}]
  %s5 = sld [smem:[#allocation0]]
  $region61: #{tpu_custom_call.1} parent=0
    _
  %s7 = ssub.s32 1, %s5
  %s8 = scalar_select 0, %s7, %s5
  $region1: #{tpu_custom_call.1} parent=0
    #allocation2 [shape = 'u8[8192]{0}', space=vmem, size = 0x2000, scoped, tag = 'input window, operand 0']
    #allocation3 [shape = 's32[2]{0}', space=sflag, size = 0x8, scoped, tag = 'scoped memory for tpu_custom_call.1']
    #allocation4 [shape = 's32[2]{0}', space=sflag, size = 0x8, scoped, tag = 'scoped memory for tpu_custom_call.1']
    #allocation5 [shape = 'u8[8192]{0}', space=vmem, size = 0x2000, scoped, tag = 'input window, operand 1']
    #allocation6 [shape = 's32[2]{0}', space=sflag, size = 0x8, scoped, tag = 'scoped memory for tpu_custom_call.1']
    #allocation7 [shape = 'u8[8192]{0}', space=vmem, size = 0x2000, scoped, tag = 'input window, operand 2, single buffered']
    #allocation8 [shape = 'u8[8192]{0}', space=vmem, size = 0x2000, scoped, tag = 'output window, operand 0']
    %9 = vsyncpa [#allocation3], 0
    %s10 = scalar_lea.sflag [#allocation3], 1
    %11 = vsyncpa %s10, 0
    %12 = vsyncpa [#allocation6], 0
    %s13 = scalar_lea.sflag [#allocation6], 1
    %14 = vsyncpa %s13, 0
    %15 = vsyncpa [#allocation4], 0
    %s16 = scalar_lea.sflag [#allocation4], 1
    %17 = vsyncpa %s16, 0
    loop: start=0, step=1, limit=4
    $region2: #{tpu_custom_call.1} parent=1 // loop_pre_header
      _
    $region3: #{tpu_custom_call.1} parent=1 // loop_header
      %s19 = sphi 0, %s23
      %p20 = scmp.ge.s32.totalorder %s19, 4
      %s26 = sphi 0, %s38
      %s27 = sphi 0, %s34
      %s28 = sphi 0, %s26
      %s29 = sphi 0, %s27
      %s30 = sphi 0, %s28
      %s31 = sphi 0, %s29
      %s43 = sphi 0, %s45
      %s46 = sphi 0, %s43
      %s47 = sphi 0, %s46
      %s63 = sphi 0, %s47
      %s71 = sphi 0, %s73
      %s74 = sphi 0, %s71
      %s75 = sphi 0, %s74
      %s91 = sphi 0, %s75
      %s95 = sphi 0, %s95
      %s97 = sphi 0, %s95
      %s98 = sphi 0, %s97
      %s112 = sphi 0, %s98
      %s116 = sphi 0, %s116
      %s118 = sphi 0, %s116
      %s119 = sphi 0, %s118
      %s133 = sphi 0, %s119
      %s141 = sphi 0, %s143
      %s144 = sphi 0, %s141
      %s145 = sphi 0, %s144
      %s161 = sphi 0, %s145
    $region4: #{tpu_custom_call.1} parent=1 // loop_header_branch
      %22 = sbr.rel (%p20) target = $region8
    $region5: #{tpu_custom_call.1} parent=1 // loop_body
      %s24 = ssub.s32 %s19, 1
      %s25 = ssub.s32 %s19, 2
      %s32 = sadd.s32 1, %s27
      %p33 = scmp.ge.s32.totalorder %s32, 2
      %s34 = scalar_select %p33, 0, %s32
      %s35 = sadd.s32 1, %s26
      %s36 = scalar_select %p33, %s35, %s26
      %p37 = scmp.ge.s32.totalorder %s36, 1
      %s38 = scalar_select %p37, 0, %s36
      %s39 = ssub.s32 %s27, %s34
      %s40 = ssub.s32 %s26, %s38
      %s41 = sor.u32 %s39, %s40
      %p42 = scmp.eq.s32.totalorder %s41, 0
      %s44 = sadd.s32 %s43, 1
      %s45 = scalar_select %p42, %s43, %s44
      %p48 = pneg %p42
      %p49 = scmp.eq.s32.totalorder %s19, 1
      %p50 = por %p48, %p49
      %p51 = scmp.ne.s32.totalorder %s43, %s46
      %p52 = scmp.eq.s32.totalorder %s19, 0
      %p53 = por %p51, %p52
      %p54 = scmp.ne.s32.totalorder %s43, %s46
      %p55 = scmp.eq.s32.totalorder %s24, 1
      %p56 = por %p54, %p55
      %p57 = scmp.ne.s32.totalorder %s46, %s47
      %p58 = scmp.eq.s32.totalorder %s24, 0
      %p59 = por %p57, %p58
      %p60 = scmp.ne.s32.totalorder %s46, %s47
      %p61 = scmp.eq.s32.totalorder %s25, 1
      %p62 = por %p60, %p61
      %p64 = scmp.ne.s32.totalorder %s47, %s63
      %p65 = scmp.eq.s32.totalorder %s25, 0
      %p66 = por %p64, %p65
      %s67 = ssub.s32 %s27, %s34
      %s68 = ssub.s32 %s26, %s38
      %s69 = sor.u32 %s67, %s68
      %p70 = scmp.eq.s32.totalorder %s69, 0
      %s72 = sadd.s32 %s71, 1
      %s73 = scalar_select %p70, %s71, %s72
      %p76 = pneg %p70
      %p77 = scmp.eq.s32.totalorder %s19, 1
      %p78 = por %p76, %p77
      %p79 = scmp.ne.s32.totalorder %s71, %s74
      %p80 = scmp.eq.s32.totalorder %s19, 0
      %p81 = por %p79, %p80
      %p82 = scmp.ne.s32.totalorder %s71, %s74
      %p83 = scmp.eq.s32.totalorder %s24, 1
      %p84 = por %p82, %p83
      %p85 = scmp.ne.s32.totalorder %s74, %s75
      %p86 = scmp.eq.s32.totalorder %s24, 0
      %p87 = por %p85, %p86
      %p88 = scmp.ne.s32.totalorder %s74, %s75
      %p89 = scmp.eq.s32.totalorder %s25, 1
      %p90 = por %p88, %p89
      %p92 = scmp.ne.s32.totalorder %s75, %s91
      %p93 = scmp.eq.s32.totalorder %s25, 0
      %p94 = por %p92, %p93
      %s96 = sadd.s32 %s95, 1
      %p99 = scmp.eq.s32.totalorder %s19, 1
      %p100 = scmp.ne.s32.totalorder %s95, %s97
      %p101 = scmp.eq.s32.totalorder %s19, 0
      %p102 = por %p100, %p101
      %p103 = scmp.ne.s32.totalorder %s95, %s97
      %p104 = scmp.eq.s32.totalorder %s24, 1
      %p105 = por %p103, %p104
      %p106 = scmp.ne.s32.totalorder %s97, %s98
      %p107 = scmp.eq.s32.totalorder %s24, 0
      %p108 = por %p106, %p107
      %p109 = scmp.ne.s32.totalorder %s97, %s98
      %p110 = scmp.eq.s32.totalorder %s25, 1
      %p111 = por %p109, %p110
      %p113 = scmp.ne.s32.totalorder %s98, %s112
      %p114 = scmp.eq.s32.totalorder %s25, 0
      %p115 = por %p113, %p114
      %s117 = sadd.s32 %s116, 1
      %p120 = scmp.eq.s32.totalorder %s19, 1
      %p121 = scmp.ne.s32.totalorder %s116, %s118
      %p122 = scmp.eq.s32.totalorder %s19, 0
      %p123 = por %p121, %p122
      %p124 = scmp.ne.s32.totalorder %s116, %s118
      %p125 = scmp.eq.s32.totalorder %s24, 1
      %p126 = por %p124, %p125
      %p127 = scmp.ne.s32.totalorder %s118, %s119
      %p128 = scmp.eq.s32.totalorder %s24, 0
      %p129 = por %p127, %p128
      %p130 = scmp.ne.s32.totalorder %s118, %s119
      %p131 = scmp.eq.s32.totalorder %s25, 1
      %p132 = por %p130, %p131
      %p134 = scmp.ne.s32.totalorder %s119, %s133
      %p135 = scmp.eq.s32.totalorder %s25, 0
      %p136 = por %p134, %p135
      %s137 = ssub.s32 %s27, %s34
      %s138 = ssub.s32 %s26, %s38
      %s139 = sor.u32 %s137, %s138
      %p140 = scmp.eq.s32.totalorder %s139, 0
      %s142 = sadd.s32 %s141, 1
      %s143 = scalar_select %p140, %s141, %s142
      %p146 = pneg %p140
      %p147 = scmp.eq.s32.totalorder %s19, 1
      %p148 = por %p146, %p147
      %p149 = scmp.ne.s32.totalorder %s141, %s144
      %p150 = scmp.eq.s32.totalorder %s19, 0
      %p151 = por %p149, %p150
      %p152 = scmp.ne.s32.totalorder %s141, %s144
      %p153 = scmp.eq.s32.totalorder %s24, 1
      %p154 = por %p152, %p153
      %p155 = scmp.ne.s32.totalorder %s144, %s145
      %p156 = scmp.eq.s32.totalorder %s24, 0
      %p157 = por %p155, %p156
      %p158 = scmp.ne.s32.totalorder %s144, %s145
      %p159 = scmp.eq.s32.totalorder %s25, 1
      %p160 = por %p158, %p159
      %p162 = scmp.ne.s32.totalorder %s145, %s161
      %p163 = scmp.eq.s32.totalorder %s25, 0
      %p164 = por %p162, %p163
      %p165 = scmp.le.s32.totalorder 1, %s19
      %p166 = scmp.lt.s32.totalorder %s19, 3
      %p167 = pnand %p165, %p166
      %p168 = pneg %p167
      // Predicated region
      $region9: #{tpu_custom_call.1} parent=5 // pred_check
        _
      $region10: #{tpu_custom_call.1} parent=5 // pred_check_branch
        %170 = sbr.rel (%p167) target = $region12
      $region11: #{tpu_custom_call.1} parent=5 // pred_region
        %s171 = ssub.s32 %s19, 1
        // Predicated region
        $region13: #{tpu_custom_call.1} parent=11 // pred_check
          %p172 = pneg %p108
        $region14: #{tpu_custom_call.1} parent=11 // pred_check_branch
          %174 = sbr.rel (%p172) target = $region16
        $region15: #{tpu_custom_call.1} parent=11 // pred_region
          %176 = vsyncadd [#allocation6], 0
          %s177 = sshll.u32 %s2, 4
          %s178 = int_to_ptr.hbm [resolvable:$true] %s177
          %s179 = sshll.u32 [#allocation7], 4
          %s180 = int_to_ptr.vmem [resolvable:$true] %s179
          %185 = dma.hbm_to_vmem [thread:$0]  %s178, 256, %s180, [#allocation6], 64, 64, 4
        $region16: #{tpu_custom_call.1} parent=11 // pred_fallthru
          _
        // Predicated region
        $region17: #{tpu_custom_call.1} parent=11 // pred_check
          %p186 = pneg %p129
        $region18: #{tpu_custom_call.1} parent=11 // pred_check_branch
          %188 = sbr.rel (%p186) target = $region20
        $region19: #{tpu_custom_call.1} parent=11 // pred_region
          _
        $region20: #{tpu_custom_call.1} parent=11 // pred_fallthru
          _
      $region12: #{tpu_custom_call.1} parent=5 // pred_fallthru
        _
      %p189 = scmp.lt.s32.totalorder %s19, 2
      // Predicated region
      $region21: #{tpu_custom_call.1} parent=5 // pred_check
        %p190 = pneg %p189
      $region22: #{tpu_custom_call.1} parent=5 // pred_check_branch
        %192 = sbr.rel (%p190) target = $region24
      $region23: #{tpu_custom_call.1} parent=5 // pred_region
        // Predicated region
        $region25: #{tpu_custom_call.1} parent=23 // pred_check
          %p193 = pneg %p53
        $region26: #{tpu_custom_call.1} parent=23 // pred_check_branch
          %195 = sbr.rel (%p193) target = $region28
        $region27: #{tpu_custom_call.1} parent=23 // pred_region
          %s196 = sand.u32 %s43, 1
          %s197 = scalar_lea.sflag [#allocation3], %s196
          %s198 = sand.u32 %s43, 1
          %s199 = smul.addr %s198, 8
          %s200 = scalar_lea.vmem [#allocation2], %s199
          %s201 = smul.u32 2, %s26
          %203 = vsyncadd %s197, 0
          %s204 = smul.addr %s27, 2
          %s205 = sadd.s32 %s201, %s204
          %s206 = smul.addr %s205, 4
          %s207 = scalar_lea.hbm %s0, %s206
          %s209 = sshll.u32 %s207, 4
          %s210 = int_to_ptr.hbm [resolvable:$true] %s209
          %s211 = sshll.u32 %s200, 4
          %s212 = int_to_ptr.vmem [resolvable:$true] %s211
          %214 = dma.hbm_to_vmem [thread:$0]  %s210, 128, %s212, %s197
        $region28: #{tpu_custom_call.1} parent=23 // pred_fallthru
          _
        // Predicated region
        $region29: #{tpu_custom_call.1} parent=23 // pred_check
          %p215 = pneg %p81
        $region30: #{tpu_custom_call.1} parent=23 // pred_check_branch
          %217 = sbr.rel (%p215) target = $region32
        $region31: #{tpu_custom_call.1} parent=23 // pred_region
          %s218 = sand.u32 %s19, 1
          %s219 = scalar_lea.sflag [#allocation6], %s218
          %s220 = sand.u32 %s71, 1
          %s221 = smul.addr %s220, 8
          %s222 = scalar_lea.vmem [#allocation5], %s221
          %s223 = smul.u32 2, %s26
          %225 = vsyncadd %s219, 0
          %s226 = smul.addr %s27, 2
          %s227 = sadd.s32 %s223, %s226
          %s228 = smul.addr %s227, 4
          %s229 = scalar_lea.hbm %s1, %s228
          %s231 = sshll.u32 %s229, 4
          %s232 = int_to_ptr.hbm [resolvable:$true] %s231
          %s233 = sshll.u32 %s222, 4
          %s234 = int_to_ptr.vmem [resolvable:$true] %s233
          %236 = dma.hbm_to_vmem [thread:$0]  %s232, 128, %s234, %s219
        $region32: #{tpu_custom_call.1} parent=23 // pred_fallthru
          _
      $region24: #{tpu_custom_call.1} parent=5 // pred_fallthru
        _
      %p237 = scmp.le.s32.totalorder 1, %s19
      %p238 = scmp.lt.s32.totalorder %s19, 3
      %p239 = pnand %p237, %p238
      %p240 = pneg %p239
      // Predicated region
      $region33: #{tpu_custom_call.1} parent=5 // pred_check
        _
      $region34: #{tpu_custom_call.1} parent=5 // pred_check_branch
        %242 = sbr.rel (%p239) target = $region36
      $region35: #{tpu_custom_call.1} parent=5 // pred_region
        %s243 = ssub.s32 %s19, 1
        %s244 = sand.u32 %s46, 1
        %s245 = scalar_lea.sflag [#allocation3], %s244
        %s246 = sand.u32 %s46, 1
        %s247 = smul.addr %s246, 8
        %s248 = scalar_lea.vmem [#allocation2], %s247
        // Predicated region
        $region37: #{tpu_custom_call.1} parent=35 // pred_check
          %p249 = pneg %p59
        $region38: #{tpu_custom_call.1} parent=35 // pred_check_branch
          %251 = sbr.rel (%p249) target = $region40
        $region39: #{tpu_custom_call.1} parent=35 // pred_region
          %253 = dma.done %s245, 128
        $region40: #{tpu_custom_call.1} parent=35 // pred_fallthru
          _
        %s254 = sand.u32 %s24, 1
        %s255 = scalar_lea.sflag [#allocation6], %s254
        %s256 = sand.u32 %s74, 1
        %s257 = smul.addr %s256, 8
        %s258 = scalar_lea.vmem [#allocation5], %s257
        // Predicated region
        $region41: #{tpu_custom_call.1} parent=35 // pred_check
          %p259 = pneg %p87
        $region42: #{tpu_custom_call.1} parent=35 // pred_check_branch
          %261 = sbr.rel (%p259) target = $region44
        $region43: #{tpu_custom_call.1} parent=35 // pred_region
          %263 = dma.done %s255, 128
        $region44: #{tpu_custom_call.1} parent=35 // pred_fallthru
          _
        // Predicated region
        $region45: #{tpu_custom_call.1} parent=35 // pred_check
          %p264 = pneg %p108
        $region46: #{tpu_custom_call.1} parent=35 // pred_check_branch
          %266 = sbr.rel (%p264) target = $region48
        $region47: #{tpu_custom_call.1} parent=35 // pred_region
          %268 = dma.done [#allocation6], 256
        $region48: #{tpu_custom_call.1} parent=35 // pred_fallthru
          _
        %s269 = sand.u32 %s46, 1
        %s270 = scalar_lea.sflag [#allocation3], %s269
        %s271 = sand.u32 %s46, 1
        %s272 = smul.addr %s271, 8
        %s273 = scalar_lea.vmem [#allocation2], %s272
        %p274 = pneg %p59
        %p275 = pneg %p56
        %s276 = sand.u32 %s24, 1
        %s277 = scalar_lea.sflag [#allocation6], %s276
        %s278 = sand.u32 %s74, 1
        %s279 = smul.addr %s278, 8
        %s280 = scalar_lea.vmem [#allocation5], %s279
        %p281 = pneg %p87
        %p282 = pneg %p84
        %p283 = pneg %p108
        %p284 = pneg %p105
        %p285 = pneg %p129
        %p286 = pneg %p126
        %p287 = pneg %p157
        %p288 = pneg %p154
        %s289 = sand.u32 %s144, 1
        %s290 = scalar_lea.sflag [#allocation4], %s289
        %s291 = sand.u32 %s144, 1
        %s292 = smul.addr %s291, 8
        %s293 = scalar_lea.vmem [#allocation8], %s292
        %s294 = smul.u32 2, %s28
        %s295 = smul.u32 2, %s28
        %s296 = smul.u32 2, %s28
        %v297 = vld [vmem:[%s248] sm:$0xff]
        %v298 = vld [vmem:[%s258] sm:$0xff]
        %v299 = vld [vmem:[#allocation7] sm:$0xf]
        %s300 = scalar_lea.vmem [#allocation7], 4
        %v301 = vld [vmem:[%s300] sm:$0xf]
        %s302 = scalar_lea.vmem [#allocation7], 8
        %v303 = vld [vmem:[%s302] sm:$0xf]
        %s304 = scalar_lea.vmem [#allocation7], 12
        %v305 = vld [vmem:[%s304] sm:$0xf]
        %v306 = vld [vmem:[%s3] sm:$0xf]
        %s307 = scalar_lea.vmem %s3, 4
        %v308 = vld [vmem:[%s307] sm:$0xf]
        %310 = vst [vmem:[#allocation1] ss:$2 sm:$0xff] %v298
        %v311 = vld.sshfl [vmem:[#allocation1] sm:$0xff pattern:$0x75316420]
        %v312 = vld.sshfl [vmem:[#allocation1 + $0x8] sm:$0xff pattern:$0x75316420]
        %vm313 = vcmask 31744
        %v315 = vsel %vm313, %v301, 0
        %vm317 = vcmask 1043456
        %v318 = vsel %vm317, %v311, 0
        %v320 = vsel %vm317, %v312, 0
        %322 = vmatpush.msra.mxu0 0.0
        %323 = vmatpush.msra.mxu0 0.0
        %324 = vmatpush.msra.mxu0 0.0
        %325 = vmatpush.msra.mxu0 0.0
        %326 = vmatpush.msra.mxu0 0.0
        %327 = vmatpush.msra.mxu0 0.0
        %328 = vmatpush.msra.mxu0 0.0
        %329 = vmatpush.msra.mxu0 0.0
        %330 = vmatpush.msra.mxu0 0.0
        %331 = vmatpush.msra.mxu0 0.0
        %332 = vmatpush.msra.mxu0 0.0
        %333 = vmatpush.msra.mxu0 0.0
        %334 = vmatpush.msra.mxu0 0.0
        %335 = vmatpush.msra.mxu0 0.0
        %336 = vmatpush.msra.mxu0 0.0
        %337 = vmatpush.msra.mxu0 %v318
        %338 = vmatmul.f32.gmra.mxu0 %v315
        %v339 = vpop.f32.mrf.mxu0
        %v340 = vadd.f32 0.0, %v339
        %341 = vdwg.mxu0
        %342 = vmatpush.msra.mxu0 0.0
        %343 = vmatpush.msra.mxu0 0.0
        %344 = vmatpush.msra.mxu0 0.0
        %345 = vmatpush.msra.mxu0 0.0
        %346 = vmatpush.msra.mxu0 0.0
        %347 = vmatpush.msra.mxu0 0.0
        %348 = vmatpush.msra.mxu0 0.0
        %349 = vmatpush.msra.mxu0 0.0
        %350 = vmatpush.msra.mxu0 0.0
        %351 = vmatpush.msra.mxu0 0.0
        %352 = vmatpush.msra.mxu0 0.0
        %353 = vmatpush.msra.mxu0 0.0
        %354 = vmatpush.msra.mxu0 0.0
        %355 = vmatpush.msra.mxu0 0.0
        %356 = vmatpush.msra.mxu0 0.0
        %357 = vmatpush.msra.mxu0 %v320
        %358 = vmatmul.f32.gmra.mxu0 %v315
        %v359 = vpop.f32.mrf.mxu0
        %v360 = vadd.f32 0.0, %v359
        %361 = vdwg.mxu0
        %363 = vst [vmem:[#allocation1] ss:$2 sm:$0xff] %v297
        %v364 = vld.sshfl [vmem:[#allocation1] sm:$0xff pattern:$0x75316420]
        %v365 = vld.sshfl [vmem:[#allocation1 + $0x8] sm:$0xff pattern:$0x75316420]
        %v367 = vsel %vm313, %v299, 0
        %v369 = vsel %vm317, %v364, 0
        %v371 = vsel %vm317, %v365, 0
        %373 = vmatpush.msra.mxu0 0.0
        %374 = vmatpush.msra.mxu0 0.0
        %375 = vmatpush.msra.mxu0 0.0
        %376 = vmatpush.msra.mxu0 0.0
        %377 = vmatpush.msra.mxu0 0.0
        %378 = vmatpush.msra.mxu0 0.0
        %379 = vmatpush.msra.mxu0 0.0
        %380 = vmatpush.msra.mxu0 0.0
        %381 = vmatpush.msra.mxu0 0.0
        %382 = vmatpush.msra.mxu0 0.0
        %383 = vmatpush.msra.mxu0 0.0
        %384 = vmatpush.msra.mxu0 0.0
        %385 = vmatpush.msra.mxu0 0.0
        %386 = vmatpush.msra.mxu0 0.0
        %387 = vmatpush.msra.mxu0 0.0
        %388 = vmatpush.msra.mxu0 %v369
        %389 = vmatmul.f32.gmra.mxu0 %v367
        %v390 = vpop.f32.mrf.mxu0
        %v391 = vadd.f32 %v340, %v390
        %392 = vdwg.mxu0
        %393 = vmatpush.msra.mxu0 0.0
        %394 = vmatpush.msra.mxu0 0.0
        %395 = vmatpush.msra.mxu0 0.0
        %396 = vmatpush.msra.mxu0 0.0
        %397 = vmatpush.msra.mxu0 0.0
        %398 = vmatpush.msra.mxu0 0.0
        %399 = vmatpush.msra.mxu0 0.0
        %400 = vmatpush.msra.mxu0 0.0
        %401 = vmatpush.msra.mxu0 0.0
        %402 = vmatpush.msra.mxu0 0.0
        %403 = vmatpush.msra.mxu0 0.0
        %404 = vmatpush.msra.mxu0 0.0
        %405 = vmatpush.msra.mxu0 0.0
        %406 = vmatpush.msra.mxu0 0.0
        %407 = vmatpush.msra.mxu0 0.0
        %408 = vmatpush.msra.mxu0 %v371
        %409 = vmatmul.f32.gmra.mxu0 %v367
        %v410 = vpop.f32.mrf.mxu0
        %v411 = vadd.f32 %v360, %v410
        %412 = vdwg.mxu0
        %414 = vset.pattern.permute.xlu0 0
        %415 = vperm.xlu0 %414, %v306
        %v416 = vpop.permute.xlu0 %415
        %v418 = vadd.f32 %v391, %v416
        %v419 = vadd.f32 %v411, %v416
        %v420 = vxor.u32 %v418, 2147483648
        %v421 = vxor.u32 %v419, 2147483648
        %v422 = vmul.f32 %v420, 1.442695
        %v423 = vpow.pop %v422
        %v424 = vmul.f32 %v421, 1.442695
        %v425 = vpow.pop %v424
        %v426 = vadd.f32 %v423, 1.0
        %v427 = vadd.f32 %v425, 1.0
        %v428 = vrcp.pop %v426
        %v429 = vmul.f32 %v426, %v428
        %v430 = vsub.f32 1.0, %v429
        %v431 = vmul.f32 %v428, %v430
        %v432 = vadd.f32 %v428, %v431
        %vm433 = vweird.f32 %v426
        %vm434 = vweird.f32 %v428
        %vm435 = vmor %vm433, %vm434
        %v436 = vsel %vm435, %v428, %v432
        %v437 = vand.u32 2147483647, %v426
        %vm438 = vcmp.eq.f32.partialorder %v437, 8.507059e+37
        %v439 = vand.u32 %v426, 2147483648
        %v440 = vor.u32 1.1754944e-38, %v439
        %v441 = vsel %vm438, %v440, %v436
        %v442 = vmul.f32 1.0, %v441
        %v443 = vrcp.pop %v427
        %v444 = vmul.f32 %v427, %v443
        %v445 = vsub.f32 1.0, %v444
        %v446 = vmul.f32 %v443, %v445
        %v447 = vadd.f32 %v443, %v446
        %vm448 = vweird.f32 %v427
        %vm449 = vweird.f32 %v443
        %vm450 = vmor %vm448, %vm449
        %v451 = vsel %vm450, %v443, %v447
        %v452 = vand.u32 2147483647, %v427
        %vm453 = vcmp.eq.f32.partialorder %v452, 8.507059e+37
        %v454 = vand.u32 %v427, 2147483648
        %v455 = vor.u32 1.1754944e-38, %v454
        %v456 = vsel %vm453, %v455, %v451
        %v457 = vmul.f32 1.0, %v456
        %v460 = vrot.slane %v457, 4
        %v461 = vsel %vm317, %v442, %v460
        %v463 = vmul.f32 %v297, %v461
        %v464 = vsub.f32 1.0, %v442
        %v465 = vsub.f32 1.0, %v457
        %v468 = vrot.slane %v465, 4
        %v469 = vsel %vm317, %v464, %v468
        %v471 = vmul.f32 %v298, %v469
        %473 = vst [vmem:[#allocation1] ss:$2 sm:$0xff] %v471
        %v474 = vld.sshfl [vmem:[#allocation1] sm:$0xff pattern:$0x75316420]
        %v475 = vld.sshfl [vmem:[#allocation1 + $0x8] sm:$0xff pattern:$0x75316420]
        %v477 = vsel %vm313, %v305, 0
        %v479 = vsel %vm317, %v474, 0
        %v481 = vsel %vm317, %v475, 0
        %483 = vmatpush.msra.mxu0 0.0
        %484 = vmatpush.msra.mxu0 0.0
        %485 = vmatpush.msra.mxu0 0.0
        %486 = vmatpush.msra.mxu0 0.0
        %487 = vmatpush.msra.mxu0 0.0
        %488 = vmatpush.msra.mxu0 0.0
        %489 = vmatpush.msra.mxu0 0.0
        %490 = vmatpush.msra.mxu0 0.0
        %491 = vmatpush.msra.mxu0 0.0
        %492 = vmatpush.msra.mxu0 0.0
        %493 = vmatpush.msra.mxu0 0.0
        %494 = vmatpush.msra.mxu0 0.0
        %495 = vmatpush.msra.mxu0 0.0
        %496 = vmatpush.msra.mxu0 0.0
        %497 = vmatpush.msra.mxu0 0.0
        %498 = vmatpush.msra.mxu0 %v479
        %499 = vmatmul.f32.gmra.mxu0 %v477
        %v500 = vpop.f32.mrf.mxu0
        %v501 = vadd.f32 0.0, %v500
        %502 = vdwg.mxu0
        %503 = vmatpush.msra.mxu0 0.0
        %504 = vmatpush.msra.mxu0 0.0
        %505 = vmatpush.msra.mxu0 0.0
        %506 = vmatpush.msra.mxu0 0.0
        %507 = vmatpush.msra.mxu0 0.0
        %508 = vmatpush.msra.mxu0 0.0
        %509 = vmatpush.msra.mxu0 0.0
        %510 = vmatpush.msra.mxu0 0.0
        %511 = vmatpush.msra.mxu0 0.0
        %512 = vmatpush.msra.mxu0 0.0
        %513 = vmatpush.msra.mxu0 0.0
        %514 = vmatpush.msra.mxu0 0.0
        %515 = vmatpush.msra.mxu0 0.0
        %516 = vmatpush.msra.mxu0 0.0
        %517 = vmatpush.msra.mxu0 0.0
        %518 = vmatpush.msra.mxu0 %v481
        %519 = vmatmul.f32.gmra.mxu0 %v477
        %v520 = vpop.f32.mrf.mxu0
        %v521 = vadd.f32 0.0, %v520
        %522 = vdwg.mxu0
        %524 = vst [vmem:[#allocation1] ss:$2 sm:$0xff] %v463
        %v525 = vld.sshfl [vmem:[#allocation1] sm:$0xff pattern:$0x75316420]
        %v526 = vld.sshfl [vmem:[#allocation1 + $0x8] sm:$0xff pattern:$0x75316420]
        %v528 = vsel %vm313, %v303, 0
        %v530 = vsel %vm317, %v525, 0
        %v532 = vsel %vm317, %v526, 0
        %534 = vmatpush.msra.mxu0 0.0
        %535 = vmatpush.msra.mxu0 0.0
        %536 = vmatpush.msra.mxu0 0.0
        %537 = vmatpush.msra.mxu0 0.0
        %538 = vmatpush.msra.mxu0 0.0
        %539 = vmatpush.msra.mxu0 0.0
        %540 = vmatpush.msra.mxu0 0.0
        %541 = vmatpush.msra.mxu0 0.0
        %542 = vmatpush.msra.mxu0 0.0
        %543 = vmatpush.msra.mxu0 0.0
        %544 = vmatpush.msra.mxu0 0.0
        %545 = vmatpush.msra.mxu0 0.0
        %546 = vmatpush.msra.mxu0 0.0
        %547 = vmatpush.msra.mxu0 0.0
        %548 = vmatpush.msra.mxu0 0.0
        %549 = vmatpush.msra.mxu0 %v530
        %550 = vmatmul.f32.gmra.mxu0 %v528
        %v551 = vpop.f32.mrf.mxu0
        %v552 = vadd.f32 %v501, %v551
        %553 = vdwg.mxu0
        %554 = vmatpush.msra.mxu0 0.0
        %555 = vmatpush.msra.mxu0 0.0
        %556 = vmatpush.msra.mxu0 0.0
        %557 = vmatpush.msra.mxu0 0.0
        %558 = vmatpush.msra.mxu0 0.0
        %559 = vmatpush.msra.mxu0 0.0
        %560 = vmatpush.msra.mxu0 0.0
        %561 = vmatpush.msra.mxu0 0.0
        %562 = vmatpush.msra.mxu0 0.0
        %563 = vmatpush.msra.mxu0 0.0
        %564 = vmatpush.msra.mxu0 0.0
        %565 = vmatpush.msra.mxu0 0.0
        %566 = vmatpush.msra.mxu0 0.0
        %567 = vmatpush.msra.mxu0 0.0
        %568 = vmatpush.msra.mxu0 0.0
        %569 = vmatpush.msra.mxu0 %v532
        %570 = vmatmul.f32.gmra.mxu0 %v528
        %v571 = vpop.f32.mrf.mxu0
        %v572 = vadd.f32 %v521, %v571
        %573 = vdwg.mxu0
        %575 = vset.pattern.permute.xlu0 0
        %576 = vperm.xlu0 %575, %v308
        %v577 = vpop.permute.xlu0 %576
        %v579 = vadd.f32 %v552, %v577
        %v580 = vadd.f32 %v572, %v577
        %v583 = vrot.slane %v580, 4
        %v584 = vsel %vm317, %v579, %v583
        %586 = vst [vmem:[%s293] sm:$0xff] %v584
        %s587 = sand.u32 %s144, 1
        %s588 = scalar_lea.sflag [#allocation4], %s587
        %s589 = sand.u32 %s144, 1
        %s590 = smul.addr %s589, 8
        %s591 = scalar_lea.vmem [#allocation8], %s590
        // Predicated region
        $region49: #{tpu_custom_call.1} parent=35 // pred_check
          %p592 = pneg %p154
        $region50: #{tpu_custom_call.1} parent=35 // pred_check_branch
          %594 = sbr.rel (%p592) target = $region52
        $region51: #{tpu_custom_call.1} parent=35 // pred_region
          %s595 = smul.u32 2, %s28
          %597 = vsyncadd %s588, 0
          %s598 = smul.addr %s29, 2
          %s599 = sadd.s32 %s595, %s598
          %s600 = smul.addr %s599, 4
          %s601 = scalar_lea.hbm %s4, %s600
          %s603 = sshll.u32 %s591, 4
          %s604 = int_to_ptr.vmem [resolvable:$true] %s603
          %s605 = sshll.u32 %s601, 4
          %s606 = int_to_ptr.hbm [resolvable:$true] %s605
          %608 = dma.vmem_to_hbm [thread:$0]  %s604, 128, %s606, %s588
        $region52: #{tpu_custom_call.1} parent=35 // pred_fallthru
          _
      $region36: #{tpu_custom_call.1} parent=5 // pred_fallthru
        _
      %p609 = scmp.le.s32.totalorder 2, %s19
      // Predicated region
      $region53: #{tpu_custom_call.1} parent=5 // pred_check
        %p610 = pneg %p609
      $region54: #{tpu_custom_call.1} parent=5 // pred_check_branch
        %612 = sbr.rel (%p610) target = $region56
      $region55: #{tpu_custom_call.1} parent=5 // pred_region
        %s613 = ssub.s32 %s19, 2
        // Predicated region
        $region57: #{tpu_custom_call.1} parent=55 // pred_check
          %p614 = pneg %p160
        $region58: #{tpu_custom_call.1} parent=55 // pred_check_branch
          %616 = sbr.rel (%p614) target = $region60
        $region59: #{tpu_custom_call.1} parent=55 // pred_region
          %s617 = sand.u32 %s145, 1
          %s618 = scalar_lea.sflag [#allocation4], %s617
          %s619 = sand.u32 %s145, 1
          %s620 = smul.addr %s619, 8
          %s621 = scalar_lea.vmem [#allocation8], %s620
          %623 = dma.done %s618, 128
        $region60: #{tpu_custom_call.1} parent=55 // pred_fallthru
          _
      $region56: #{tpu_custom_call.1} parent=5 // pred_fallthru
        _
    $region6: #{tpu_custom_call.1} parent=1 // loop_footer
      %s23 = sadd.s32 1, %s19
    $region7: #{tpu_custom_call.1} parent=1 // loop_footer_branch
      %18 = sbr.rel target = $region3
    $region8: #{tpu_custom_call.1} parent=1 // loop_exit
      _
    %624 = vsyncpa [#allocation3], 1
    %s625 = scalar_lea.sflag [#allocation3], 1
    %626 = vsyncpa %s625, 1
    %627 = vsyncpa [#allocation6], 1
    %s628 = scalar_lea.sflag [#allocation6], 1
    %629 = vsyncpa %s628, 1
    %630 = vsyncpa [#allocation4], 1
    %s631 = scalar_lea.sflag [#allocation4], 1
    %632 = vsyncpa %s631, 1

</llo_original>
